<compile_context>
chip_gen: v7x
topology: tpu7x:2x2x1
jax: 0.10.0
libtpu: 0.0.40
codegen_flags: <defaults>
</compile_context>

<pallas_src>
import math

import jax
import jax.numpy as jnp
from jax.experimental import pallas as pl
from jax.experimental.pallas import tpu as pltpu


# ----------------------------------------------------------------------------
# Kernel
# ----------------------------------------------------------------------------
def decoder_lstm_kernel(x_ref, h_ref, c_ref, wg_ref, bg_ref, wout_ref, bout_ref,
                        pred_ref, hout_ref, cout_ref,
                        hbf_ref, m_ref, s_ref):
    """Grid = (n_vocab_tiles,).

    x_ref    : (B, H)   f32   embedded tokens           (resident)
    h_ref    : (B, H)   f32   previous hidden state     (resident)
    c_ref    : (B, H)   f32   previous cell state       (resident)
    wg_ref   : (2H, 4H) bf16  [W_ih ; W_hh] stacked     (resident)
    bg_ref   : (1, 4H)  f32   b_ih + b_hh               (resident)
    wout_ref : (H, TV)  bf16  vocab tile of W_out       (streamed over grid)
    bout_ref : (1, V)   f32   full output bias          (resident)
    pred_ref : (B, V)   f32   log-probs                 (resident output)
    hout_ref : (B, H)   f32   new hidden state          (resident output)
    cout_ref : (B, H)   f32   new cell state            (resident output)
    hbf_ref  : (B, H)   bf16  scratch: h_new cached for the MXU
    m_ref    : (B, 1)   f32   scratch: running row max
    s_ref    : (B, 1)   f32   scratch: running row sum-exp
    """
    j = pl.program_id(0)
    n_tiles = pl.num_programs(0)
    H = h_ref.shape[1]
    tv = wout_ref.shape[1]

    # ---- LSTM cell + softmax-state init: runs once, on the first tile ------
    @pl.when(j == 0)
    def _cell():
        # One fused gate matmul: [x | h] @ [W_ih ; W_hh] -> (B, 4H), f32 acc.
        # Cast to bf16 *before* the concat so the copy is half-width.
        xh = jnp.concatenate([x_ref[...].astype(wg_ref.dtype),
                              h_ref[...].astype(wg_ref.dtype)], axis=1)
        gates = jnp.dot(xh, wg_ref[...],
                        preferred_element_type=jnp.float32) + bg_ref[...]
        # PyTorch nn.LSTM gate order [i | f | g | o]; H is a multiple of 128
        # so every slice is lane-aligned (pure VPU, no cross-lane shuffles).
        i_g = jax.nn.sigmoid(gates[:, 0 * H:1 * H])
        f_g = jax.nn.sigmoid(gates[:, 1 * H:2 * H])
        g_g = jnp.tanh(gates[:, 2 * H:3 * H])
        o_g = jax.nn.sigmoid(gates[:, 3 * H:4 * H])
        c_new = f_g * c_ref[...] + i_g * g_g
        h_new = o_g * jnp.tanh(c_new)
        cout_ref[...] = c_new
        hout_ref[...] = h_new
        hbf_ref[...] = h_new.astype(hbf_ref.dtype)   # cached once for the MXU
        # Online log-softmax state.
        m_ref[...] = jnp.full(m_ref.shape, -jnp.inf, m_ref.dtype)
        s_ref[...] = jnp.zeros(s_ref.shape, s_ref.dtype)

    # ---- Output projection for this vocab tile -----------------------------
    off = pl.multiple_of(j * tv, tv)                            # 128-aligned
    logits = jnp.dot(hbf_ref[...], wout_ref[...],
                     preferred_element_type=jnp.float32) \
             + bout_ref[:, pl.ds(off, tv)]                      # (B, TV) f32
    # Unmasked, lane-dense store into the resident (B, V) slab.
    pred_ref[:, pl.ds(off, tv)] = logits

    # ---- Streaming (flash-style) max / sum-exp update -----------------------
    m_old = m_ref[...]                                          # (B, 1)
    m_new = jnp.maximum(m_old, jnp.max(logits, axis=1, keepdims=True))
    s_ref[...] = (s_ref[...] * jnp.exp(m_old - m_new)
                  + jnp.sum(jnp.exp(logits - m_new), axis=1, keepdims=True))
    m_ref[...] = m_new

    # ---- Final normalization: a single subtract pass over (B, V) -----------
    @pl.when(j == n_tiles - 1)
    def _normalize():
        pred_ref[...] = pred_ref[...] - (m_ref[...] + jnp.log(s_ref[...]))


# ----------------------------------------------------------------------------
# Wrapper (mirrors DecoderLSTM.forward)
# ----------------------------------------------------------------------------
def decoder_lstm_forward(x_ids, h, c, params, *, tile_v=512):
    """x_ids: (B,) int ids; h, c: (1, B, H).
    Returns (pred (B, V) log-probs, (h_new (1,B,H), c_new (1,B,H)))."""
    emb = params["embedding"]          # (V, H)  f32
    w_gates = params["w_gates"]        # (2H, 4H) bf16, [W_ih ; W_hh] pre-stacked
    b_gates = params["b_gates"]        # (1, 4H)  f32, b_ih + b_hh
    w_out = params["w_out"]            # (H, V)   bf16
    b_out = params["b_out"]            # (1, V)   f32

    B = x_ids.shape[0]
    H = w_gates.shape[0] // 2
    V = w_out.shape[1]
    assert V % 128 == 0, "vocab must be lane-dense (multiple of 128)"

    # Snap tile_v to a 128-multiple divisor of V, no larger than requested.
    tile_v = max(128, min((tile_v // 128) * 128, V))
    if V % tile_v != 0:
        tile_v = max(t for t in range(128, tile_v + 1, 128) if V % t == 0)
    n_tiles = V // tile_v

    # Glue: embedding gather + squeeze the seq/layer dim.
    # TODO(synk): fuse the gather via scalar-prefetched token ids once a
    # multi-step decode loop moves inside the kernel.
    x_emb = jnp.take(emb, x_ids.astype(jnp.int32), axis=0)   # (B, H) f32
    h2 = h.reshape(B, H)
    c2 = c.reshape(B, H)

    const2 = lambda j: (0, 0)

    def _nb(shape, dtype):
        return math.prod(shape) * jnp.dtype(dtype).itemsize

    # VMEM budget: resident blocks + double-buffered W_out tiles (+ headroom).
    resident = (3 * _nb((B, H), jnp.float32)                # x, h, c
                + _nb((2 * H, 4 * H), w_gates.dtype)        # gate weights
                + _nb((1, 4 * H), jnp.float32)              # gate bias
                + _nb((1, V), jnp.float32)                  # b_out (resident)
                + _nb((B, V), jnp.float32)                  # pred (resident)
                + 2 * _nb((B, H), jnp.float32)              # h_new, c_new
                + _nb((B, H), jnp.bfloat16)                 # bf16 h scratch
                + 2 * _nb((B, 1), jnp.float32))             # m, s scratch
    streamed = 2 * _nb((H, tile_v), w_out.dtype)            # double-buffered W_out
    # TODO(synk): on v7x re-budget against 64 MiB physical VMEM.
    vmem_limit = int(max(32 << 20, min(96 << 20,
                                       2 * (resident + streamed) + (4 << 20))))

    cost = pl.CostEstimate(
        flops=2 * B * (2 * H) * (4 * H) + 2 * B * H * V,
        transcendentals=B * (5 * H + V),
        bytes_accessed=(_nb((B, H), jnp.float32) * 3
                        + _nb((2 * H, 4 * H), w_gates.dtype)
                        + _nb((1, 4 * H), jnp.float32)
                        + _nb((H, V), w_out.dtype)
                        + _nb((1, V), jnp.float32)
                        + _nb((B, V), jnp.float32)
                        + 2 * _nb((B, H), jnp.float32)),
    )

    pred, h_new, c_new = pl.pallas_call(
        decoder_lstm_kernel,
        grid=(n_tiles,),
        in_specs=[
            pl.BlockSpec((B, H), const2),                    # x_emb     (resident)
            pl.BlockSpec((B, H), const2),                    # h         (resident)
            pl.BlockSpec((B, H), const2),                    # c         (resident)
            pl.BlockSpec((2 * H, 4 * H), const2),            # [Wih;Whh] (resident)
            pl.BlockSpec((1, 4 * H), const2),                # b_gates   (resident)
            pl.BlockSpec((H, tile_v), lambda j: (0, j)),     # W_out     (streamed)
            pl.BlockSpec((1, V), const2),                    # b_out     (resident)
        ],
        out_specs=(
            pl.BlockSpec((B, V), const2),                    # log-probs (resident)
            pl.BlockSpec((B, H), const2),                    # h_new
            pl.BlockSpec((B, H), const2),                    # c_new
        ),
        out_shape=(
            jax.ShapeDtypeStruct((B, V), jnp.float32),
            jax.ShapeDtypeStruct((B, H), jnp.float32),
            jax.ShapeDtypeStruct((B, H), jnp.float32),
        ),
        scratch_shapes=[
            pltpu.VMEM((B, H), jnp.bfloat16),                # h_new cached (bf16)
            pltpu.VMEM((B, 1), jnp.float32),                 # running max m
            pltpu.VMEM((B, 1), jnp.float32),                 # running sum-exp s
        ],
        # h -> h_new, c -> c_new update in place (no fresh HBM state buffers).
        input_output_aliases={1: 1, 2: 2},
        compiler_params=pltpu.CompilerParams(
            # Resident state/output across the vocab-tile axis => sequential.
            dimension_semantics=("arbitrary",),
            vmem_limit_bytes=vmem_limit,
        ),
        cost_estimate=cost,
    )(x_emb, h2, c2, w_gates, b_gates, w_out, b_out)

    return pred, (h_new[None, ...], c_new[None, ...])


# ----------------------------------------------------------------------------
# Parameter construction / init_hidden glue
# ----------------------------------------------------------------------------
def make_params(key, visual_feature_size, hidden, vocab, weight_dtype=jnp.bfloat16):
    ks = jax.random.split(key, 8)
    s = 0.1
    w_ih = s * jax.random.normal(ks[1], (hidden, 4 * hidden), jnp.float32)
    w_hh = s * jax.random.normal(ks[2], (hidden, 4 * hidden), jnp.float32)
    return {
        "embedding": s * jax.random.normal(ks[0], (vocab, hidden), jnp.float32),
        # [W_ih ; W_hh] pre-transposed from PyTorch (4H,H) and stacked once.
        "w_gates": jnp.concatenate([w_ih, w_hh], axis=0).astype(weight_dtype),
        "b_gates": s * jax.random.normal(ks[3], (1, 4 * hidden), jnp.float32),
        "w_out": (s * jax.random.normal(ks[4], (hidden, vocab), jnp.float32)
                  ).astype(weight_dtype),
        "b_out": s * jax.random.normal(ks[5], (1, vocab), jnp.float32),
        "w_in": s * jax.random.normal(ks[6], (visual_feature_size, hidden), jnp.float32),
        "b_in": s * jax.random.normal(ks[7], (hidden,), jnp.float32),
    }


def init_hidden(vf, params):
    """Mirrors DecoderLSTM.init_hidden (plain JAX linear_in glue)."""
    h0 = vf @ params["w_in"] + params["b_in"]      # (B, H)
    return h0[None, ...]                           # (1, B, H)


# ----------------------------------------------------------------------------
# Pure-JAX reference (same bf16 weight rounding as the kernel)
# ----------------------------------------------------------------------------
def _reference_forward(x_ids, h, c, params):
    B = x_ids.shape[0]
    H = params["w_gates"].shape[0] // 2
    wdt = params["w_gates"].dtype
    x = jnp.take(params["embedding"], x_ids.astype(jnp.int32), axis=0)
    h2 = h.reshape(B, H)
    c2 = c.reshape(B, H)
    xh = jnp.concatenate([x, h2], axis=1).astype(wdt).astype(jnp.float32)
    wg = params["w_gates"].astype(jnp.float32)
    gates = xh @ wg + params["b_gates"]
    i = jax.nn.sigmoid(gates[:, :H])
    f = jax.nn.sigmoid(gates[:, H:2 * H])
    g = jnp.tanh(gates[:, 2 * H:3 * H])
    o = jax.nn.sigmoid(gates[:, 3 * H:])
    c_new = f * c2 + i * g
    h_new = o * jnp.tanh(c_new)
    logits = (h_new.astype(wdt).astype(jnp.float32)
              @ params["w_out"].astype(jnp.float32) + params["b_out"])
    pred = jax.nn.log_softmax(logits, axis=1)
    return pred, (h_new[None], c_new[None])


# ----------------------------------------------------------------------------
# Main
# ----------------------------------------------------------------------------
if __name__ == "__main__":
    B = 8      # batch (fills the 8 sublanes)
    VF = 16    # visual_feature_size
    H = 128    # lstm_hidden_size (lane-dense)
    V = 512    # vocab_size (lane-dense)

    key = jax.random.PRNGKey(0)
    k_tok, k_vf, k_params = jax.random.split(key, 3)

    params = make_params(k_params, VF, H, V)

    x_ids = jax.random.randint(k_tok, (B,), 0, V, dtype=jnp.int32)
    vf = jax.random.normal(k_vf, (B, VF), jnp.float32)

    h0 = init_hidden(vf, params)                 # (1, B, H)
    c0 = jnp.zeros((1, B, H), jnp.float32)       # init_cell

    # Small tile_v here so the test exercises the multi-tile streaming path
    # (online softmax + 128-aligned dynamic stores); real vocabs use the
    # larger default tile_v=512.
    fwd = jax.jit(lambda xi, hh, cc, pp: decoder_lstm_forward(xi, hh, cc, pp,
                                                              tile_v=128))
    pred, (h1, c1) = fwd(x_ids, h0, c0, params)
    jax.block_until_ready((pred, h1, c1))

    # Sanity check vs. pure-JAX reference (same bf16 weight rounding).
    ref_pred, (ref_h, ref_c) = _reference_forward(x_ids, h0, c0, params)
    assert jnp.allclose(pred, ref_pred, atol=1e-3, rtol=1e-3), \
        float(jnp.max(jnp.abs(pred - ref_pred)))
    assert jnp.allclose(h1, ref_h, atol=1e-3, rtol=1e-3)
    assert jnp.allclose(c1, ref_c, atol=1e-3, rtol=1e-3)

    print("KERNEL_OK")
</pallas_src>

<mosaic_0001>
module attributes {stable_mosaic.version = 11 : i64} {
  func.func @decoder_lstm_kernel(%arg0: i32, %arg1: memref<8x128xf32, #tpu.memory_space<vmem>>, %arg2: memref<8x128xf32, #tpu.memory_space<vmem>>, %arg3: memref<8x128xf32, #tpu.memory_space<vmem>>, %arg4: memref<256x512xbf16, #tpu.memory_space<vmem>>, %arg5: memref<1x512xf32, #tpu.memory_space<vmem>>, %arg6: memref<128x128xbf16, #tpu.memory_space<vmem>>, %arg7: memref<1x512xf32, #tpu.memory_space<vmem>>, %arg8: memref<8x512xf32, #tpu.memory_space<vmem>>, %arg9: memref<8x128xf32, #tpu.memory_space<vmem>>, %arg10: memref<8x128xf32, #tpu.memory_space<vmem>>, %arg11: memref<8x128xbf16, #tpu.memory_space<vmem>>, %arg12: memref<8x1xf32, #tpu.memory_space<vmem>>, %arg13: memref<8x1xf32, #tpu.memory_space<vmem>>) attributes {dimension_semantics = [#tpu.dimension_semantics<arbitrary>], iteration_bounds = array<i64: 4>, scalar_prefetch = 0 : i64, scratch_operands = 3 : i64, tpu.core_type = #tpu.core_type<tc>, window_params = [{pipeline_mode = #tpu.pipeline_mode<synchronous>, transform_indices = @transform_0, window_bounds = array<i64: 8, 128>}, {pipeline_mode = #tpu.pipeline_mode<synchronous>, transform_indices = @transform_1, window_bounds = array<i64: 8, 128>}, {pipeline_mode = #tpu.pipeline_mode<synchronous>, transform_indices = @transform_2, window_bounds = array<i64: 8, 128>}, {pipeline_mode = #tpu.pipeline_mode<synchronous>, transform_indices = @transform_3, window_bounds = array<i64: 256, 512>}, {pipeline_mode = #tpu.pipeline_mode<synchronous>, transform_indices = @transform_4, window_bounds = array<i64: 1, 512>}, {transform_indices = @transform_5, window_bounds = array<i64: 128, 128>}, {pipeline_mode = #tpu.pipeline_mode<synchronous>, transform_indices = @transform_6, window_bounds = array<i64: 1, 512>}, {pipeline_mode = #tpu.pipeline_mode<synchronous>, transform_indices = @transform_7, window_bounds = array<i64: 8, 512>}, {pipeline_mode = #tpu.pipeline_mode<synchronous>, transform_indices = @transform_8, window_bounds = array<i64: 8, 128>}, {pipeline_mode = #tpu.pipeline_mode<synchronous>, transform_indices = @transform_9, window_bounds = array<i64: 8, 128>}]} {
    %c0_i32 = arith.constant 0 : i32
    %0 = arith.cmpi eq, %arg0, %c0_i32 : i32
    %1 = arith.extui %0 : i1 to i32
    %c0_i32_0 = arith.constant 0 : i32
    %2 = arith.cmpi ne, %1, %c0_i32_0 : i32
    scf.if %2 {
      %c0_17 = arith.constant 0 : index
      %c0_18 = arith.constant 0 : index
      %33 = vector.load %arg1[%c0_17, %c0_18] : memref<8x128xf32, #tpu.memory_space<vmem>>, vector<8x128xf32>
      %34 = arith.truncf %33 : vector<8x128xf32> to vector<8x128xbf16>
      %c0_19 = arith.constant 0 : index
      %c0_20 = arith.constant 0 : index
      %35 = vector.load %arg2[%c0_19, %c0_20] : memref<8x128xf32, #tpu.memory_space<vmem>>, vector<8x128xf32>
      %36 = arith.truncf %35 : vector<8x128xf32> to vector<8x128xbf16>
      %37 = tpu.concatenate %34, %36 in 1 : vector<8x128xbf16>, vector<8x128xbf16> -> vector<8x256xbf16>
      %c0_21 = arith.constant 0 : index
      %c0_22 = arith.constant 0 : index
      %38 = vector.load %arg4[%c0_21, %c0_22] : memref<256x512xbf16, #tpu.memory_space<vmem>>, vector<256x512xbf16>
      %cst_23 = arith.constant dense<0.000000e+00> : vector<8x512xf32>
      %39 = tpu.matmul %37, %38, %cst_23 {dimension_numbers = #tpu.dot_dimension_numbers<[1], [0], [0], [1], [0, 0, 1, 1], [], []>} : vector<8x256xbf16>, vector<256x512xbf16>, vector<8x512xf32> -> vector<8x512xf32>
      %c0_24 = arith.constant 0 : index
      %c0_25 = arith.constant 0 : index
      %40 = vector.load %arg5[%c0_24, %c0_25] : memref<1x512xf32, #tpu.memory_space<vmem>>, vector<1x512xf32>
      %41 = vector.broadcast %40 : vector<1x512xf32> to vector<8x512xf32>
      %42 = arith.addf %39, %41 : vector<8x512xf32>
      %43 = vector.extract_strided_slice %42 {offsets = [0, 0], sizes = [8, 128], strides = [1, 1]} : vector<8x512xf32> to vector<8x128xf32>
      %44 = arith.negf %43 : vector<8x128xf32>
      %45 = math.exp %44 : vector<8x128xf32>
      %cst_26 = arith.constant 1.000000e+00 : f32
      %46 = vector.broadcast %cst_26 : f32 to vector<8x128xf32>
      %47 = arith.addf %46, %45 : vector<8x128xf32>
      %48 = arith.divf %46, %47 : vector<8x128xf32>
      %49 = vector.extract_strided_slice %42 {offsets = [0, 128], sizes = [8, 128], strides = [1, 1]} : vector<8x512xf32> to vector<8x128xf32>
      %50 = arith.negf %49 : vector<8x128xf32>
      %51 = math.exp %50 : vector<8x128xf32>
      %cst_27 = arith.constant 1.000000e+00 : f32
      %52 = vector.broadcast %cst_27 : f32 to vector<8x128xf32>
      %53 = arith.addf %52, %51 : vector<8x128xf32>
      %54 = arith.divf %52, %53 : vector<8x128xf32>
      %55 = vector.extract_strided_slice %42 {offsets = [0, 256], sizes = [8, 128], strides = [1, 1]} : vector<8x512xf32> to vector<8x128xf32>
      %56 = math.tanh %55 : vector<8x128xf32>
      %57 = vector.extract_strided_slice %42 {offsets = [0, 384], sizes = [8, 128], strides = [1, 1]} : vector<8x512xf32> to vector<8x128xf32>
      %58 = arith.negf %57 : vector<8x128xf32>
      %59 = math.exp %58 : vector<8x128xf32>
      %cst_28 = arith.constant 1.000000e+00 : f32
      %60 = vector.broadcast %cst_28 : f32 to vector<8x128xf32>
      %61 = arith.addf %60, %59 : vector<8x128xf32>
      %62 = arith.divf %60, %61 : vector<8x128xf32>
      %c0_29 = arith.constant 0 : index
      %c0_30 = arith.constant 0 : index
      %63 = vector.load %arg3[%c0_29, %c0_30] : memref<8x128xf32, #tpu.memory_space<vmem>>, vector<8x128xf32>
      %64 = arith.mulf %54, %63 : vector<8x128xf32>
      %65 = arith.mulf %48, %56 : vector<8x128xf32>
      %66 = arith.addf %64, %65 : vector<8x128xf32>
      %67 = math.tanh %66 : vector<8x128xf32>
      %68 = arith.mulf %62, %67 : vector<8x128xf32>
      %c0_31 = arith.constant 0 : index
      %c0_32 = arith.constant 0 : index
      %69 = vector.load %arg10[%c0_31, %c0_32] : memref<8x128xf32, #tpu.memory_space<vmem>>, vector<8x128xf32>
      tpu.vector_store %arg10[%c0_31, %c0_32], %66 {strides = array<i32>} : memref<8x128xf32, #tpu.memory_space<vmem>>, vector<8x128xf32>,
      %c0_33 = arith.constant 0 : index
      %c0_34 = arith.constant 0 : index
      %70 = vector.load %arg9[%c0_33, %c0_34] : memref<8x128xf32, #tpu.memory_space<vmem>>, vector<8x128xf32>
      tpu.vector_store %arg9[%c0_33, %c0_34], %68 {strides = array<i32>} : memref<8x128xf32, #tpu.memory_space<vmem>>, vector<8x128xf32>,
      %71 = arith.truncf %68 : vector<8x128xf32> to vector<8x128xbf16>
      %c0_35 = arith.constant 0 : index
      %c0_36 = arith.constant 0 : index
      %72 = vector.load %arg11[%c0_35, %c0_36] : memref<8x128xbf16, #tpu.memory_space<vmem>>, vector<8x128xbf16>
      tpu.vector_store %arg11[%c0_35, %c0_36], %71 {strides = array<i32>} : memref<8x128xbf16, #tpu.memory_space<vmem>>, vector<8x128xbf16>,
      %cst_37 = arith.constant 0xFF800000 : f32
      %73 = vector.broadcast %cst_37 : f32 to vector<8x1xf32>
      %c0_38 = arith.constant 0 : index
      %c0_39 = arith.constant 0 : index
      %74 = vector.load %arg12[%c0_38, %c0_39] : memref<8x1xf32, #tpu.memory_space<vmem>>, vector<8x1xf32>
      tpu.vector_store %arg12[%c0_38, %c0_39], %73 {strides = array<i32>} : memref<8x1xf32, #tpu.memory_space<vmem>>, vector<8x1xf32>,
      %cst_40 = arith.constant 0.000000e+00 : f32
      %75 = vector.broadcast %cst_40 : f32 to vector<8x1xf32>
      %c0_41 = arith.constant 0 : index
      %c0_42 = arith.constant 0 : index
      %76 = vector.load %arg13[%c0_41, %c0_42] : memref<8x1xf32, #tpu.memory_space<vmem>>, vector<8x1xf32>
      tpu.vector_store %arg13[%c0_41, %c0_42], %75 {strides = array<i32>} : memref<8x1xf32, #tpu.memory_space<vmem>>, vector<8x1xf32>,
    } else {
    }
    %c128_i32 = arith.constant 128 : i32
    %3 = arith.muli %arg0, %c128_i32 : i32
    %4 = tpu.assume_multiple %3, 128 : i32
    %c0 = arith.constant 0 : index
    %c0_1 = arith.constant 0 : index
    %5 = vector.load %arg11[%c0, %c0_1] : memref<8x128xbf16, #tpu.memory_space<vmem>>, vector<8x128xbf16>
    %c0_2 = arith.constant 0 : index
    %c0_3 = arith.constant 0 : index
    %6 = vector.load %arg6[%c0_2, %c0_3] : memref<128x128xbf16, #tpu.memory_space<vmem>>, vector<128x128xbf16>
    %cst = arith.constant dense<0.000000e+00> : vector<8x128xf32>
    %7 = tpu.matmul %5, %6, %cst {dimension_numbers = #tpu.dot_dimension_numbers<[1], [0], [0], [1], [0, 0, 1, 1], [], []>} : vector<8x128xbf16>, vector<128x128xbf16>, vector<8x128xf32> -> vector<8x128xf32>
    %c0_4 = arith.constant 0 : index
    %8 = arith.index_cast %4 : i32 to index
    %9 = vector.load %arg7[%c0_4, %8] : memref<1x512xf32, #tpu.memory_space<vmem>>, vector<1x128xf32>
    %10 = vector.broadcast %9 : vector<1x128xf32> to vector<8x128xf32>
    %11 = arith.addf %7, %10 : vector<8x128xf32>
    %c0_5 = arith.constant 0 : index
    %12 = arith.index_cast %4 : i32 to index
    %13 = vector.load %arg8[%c0_5, %12] : memref<8x512xf32, #tpu.memory_space<vmem>>, vector<8x128xf32>
    tpu.vector_store %arg8[%c0_5, %12], %11 {strides = array<i32>} : memref<8x512xf32, #tpu.memory_space<vmem>>, vector<8x128xf32>,
    %c0_6 = arith.constant 0 : index
    %c0_7 = arith.constant 0 : index
    %14 = vector.load %arg12[%c0_6, %c0_7] : memref<8x1xf32, #tpu.memory_space<vmem>>, vector<8x1xf32>
    %cst_8 = arith.constant dense<0xFF800000> : vector<8xf32>
    %15 = vector.multi_reduction <maximumf>, %11, %cst_8 [1] : vector<8x128xf32> to vector<8xf32>
    %16 = vector.shape_cast %15 : vector<8xf32> to vector<8x1xf32>
    %17 = arith.maximumf %14, %16 : vector<8x1xf32>
    %c0_9 = arith.constant 0 : index
    %c0_10 = arith.constant 0 : index
    %18 = vector.load %arg13[%c0_9, %c0_10] : memref<8x1xf32, #tpu.memory_space<vmem>>, vector<8x1xf32>
    %19 = arith.subf %14, %17 : vector<8x1xf32>
    %20 = math.exp %19 : vector<8x1xf32>
    %21 = arith.mulf %18, %20 : vector<8x1xf32>
    %22 = vector.broadcast %17 : vector<8x1xf32> to vector<8x128xf32>
    %23 = arith.subf %11, %22 : vector<8x128xf32>
    %24 = math.exp %23 : vector<8x128xf32>
    %cst_11 = arith.constant dense<0.000000e+00> : vector<8xf32>
    %25 = vector.multi_reduction <add>, %24, %cst_11 [1] : vector<8x128xf32> to vector<8xf32>
    %26 = vector.shape_cast %25 : vector<8xf32> to vector<8x1xf32>
    %27 = arith.addf %21, %26 : vector<8x1xf32>
    %c0_12 = arith.constant 0 : index
    %c0_13 = arith.constant 0 : index
    %28 = vector.load %arg13[%c0_12, %c0_13] : memref<8x1xf32, #tpu.memory_space<vmem>>, vector<8x1xf32>
    tpu.vector_store %arg13[%c0_12, %c0_13], %27 {strides = array<i32>} : memref<8x1xf32, #tpu.memory_space<vmem>>, vector<8x1xf32>,
    %c0_14 = arith.constant 0 : index
    %c0_15 = arith.constant 0 : index
    %29 = vector.load %arg12[%c0_14, %c0_15] : memref<8x1xf32, #tpu.memory_space<vmem>>, vector<8x1xf32>
    tpu.vector_store %arg12[%c0_14, %c0_15], %17 {strides = array<i32>} : memref<8x1xf32, #tpu.memory_space<vmem>>, vector<8x1xf32>,
    %c3_i32 = arith.constant 3 : i32
    %30 = arith.cmpi eq, %arg0, %c3_i32 : i32
    %31 = arith.extui %30 : i1 to i32
    %c0_i32_16 = arith.constant 0 : i32
    %32 = arith.cmpi ne, %31, %c0_i32_16 : i32
    scf.if %32 {
      %c0_17 = arith.constant 0 : index
      %c0_18 = arith.constant 0 : index
      %33 = vector.load %arg8[%c0_17, %c0_18] : memref<8x512xf32, #tpu.memory_space<vmem>>, vector<8x512xf32>
      %c0_19 = arith.constant 0 : index
      %c0_20 = arith.constant 0 : index
      %34 = vector.load %arg12[%c0_19, %c0_20] : memref<8x1xf32, #tpu.memory_space<vmem>>, vector<8x1xf32>
      %c0_21 = arith.constant 0 : index
      %c0_22 = arith.constant 0 : index
      %35 = vector.load %arg13[%c0_21, %c0_22] : memref<8x1xf32, #tpu.memory_space<vmem>>, vector<8x1xf32>
      %36 = math.log %35 : vector<8x1xf32>
      %37 = arith.addf %34, %36 : vector<8x1xf32>
      %38 = vector.broadcast %37 : vector<8x1xf32> to vector<8x512xf32>
      %39 = arith.subf %33, %38 : vector<8x512xf32>
      %c0_23 = arith.constant 0 : index
      %c0_24 = arith.constant 0 : index
      %40 = vector.load %arg8[%c0_23, %c0_24] : memref<8x512xf32, #tpu.memory_space<vmem>>, vector<8x512xf32>
      tpu.vector_store %arg8[%c0_23, %c0_24], %39 {strides = array<i32>} : memref<8x512xf32, #tpu.memory_space<vmem>>, vector<8x512xf32>,
    } else {
    }
    return
  }
  func.func @transform_0(%arg0: i32) -> (i32, i32) {
    %c0_i32 = arith.constant 0 : i32
    %c0_i32_0 = arith.constant 0 : i32
    %c0_i32_1 = arith.constant 0 : i32
    return %c0_i32, %c0_i32_0 : i32, i32
  }
  func.func @transform_1(%arg0: i32) -> (i32, i32) {
    %c0_i32 = arith.constant 0 : i32
    %c0_i32_0 = arith.constant 0 : i32
    %c0_i32_1 = arith.constant 0 : i32
    return %c0_i32, %c0_i32_0 : i32, i32
  }
  func.func @transform_2(%arg0: i32) -> (i32, i32) {
    %c0_i32 = arith.constant 0 : i32
    %c0_i32_0 = arith.constant 0 : i32
    %c0_i32_1 = arith.constant 0 : i32
    return %c0_i32, %c0_i32_0 : i32, i32
  }
  func.func @transform_3(%arg0: i32) -> (i32, i32) {
    %c0_i32 = arith.constant 0 : i32
    %c0_i32_0 = arith.constant 0 : i32
    %c0_i32_1 = arith.constant 0 : i32
    return %c0_i32, %c0_i32_0 : i32, i32
  }
  func.func @transform_4(%arg0: i32) -> (i32, i32) {
    %c0_i32 = arith.constant 0 : i32
    %c0_i32_0 = arith.constant 0 : i32
    %c0_i32_1 = arith.constant 0 : i32
    return %c0_i32, %c0_i32_0 : i32, i32
  }
  func.func @transform_5(%arg0: i32) -> (i32, i32) {
    %c0_i32 = arith.constant 0 : i32
    %c0_i32_0 = arith.constant 0 : i32
    return %c0_i32, %arg0 : i32, i32
  }
  func.func @transform_6(%arg0: i32) -> (i32, i32) {
    %c0_i32 = arith.constant 0 : i32
    %c0_i32_0 = arith.constant 0 : i32
    %c0_i32_1 = arith.constant 0 : i32
    return %c0_i32, %c0_i32_0 : i32, i32
  }
  func.func @transform_7(%arg0: i32) -> (i32, i32) {
    %c0_i32 = arith.constant 0 : i32
    %c0_i32_0 = arith.constant 0 : i32
    %c0_i32_1 = arith.constant 0 : i32
    return %c0_i32, %c0_i32_0 : i32, i32
  }
  func.func @transform_8(%arg0: i32) -> (i32, i32) {
    %c0_i32 = arith.constant 0 : i32
    %c0_i32_0 = arith.constant 0 : i32
    %c0_i32_1 = arith.constant 0 : i32
    return %c0_i32, %c0_i32_0 : i32, i32
  }
  func.func @transform_9(%arg0: i32) -> (i32, i32) {
    %c0_i32 = arith.constant 0 : i32
    %c0_i32_0 = arith.constant 0 : i32
    %c0_i32_1 = arith.constant 0 : i32
    return %c0_i32, %c0_i32_0 : i32, i32
  }
}

</mosaic_0001>

<llo_original>
// kernel: _lambda_.1
$region0: #{_lambda_.1}
  #allocation0 [shape = 'u32[]', space=smem, size = 0x4, offset = 0x4, fixed_abs, tag = 'smem constant byte address 0x4 - core index']
  #allocation1 [shape = 'u32[144,128]{1,0:T(1,128)}', space=vmem, size = 0x12000, scoped, tag = 'internal scratch']
  #allocation2 [shape = 'bf16[8,128]{1,0:T(8,128)(2,1)}', space=vmem, size = 0x800, scoped, tag = 'scratch operand']
  #allocation3 [shape = 'f32[8,1]{1,0:T(8,128)}', space=vmem, size = 0x1000, scoped, tag = 'scratch operand']
  #allocation4 [shape = 'f32[8,1]{1,0:T(8,128)}', space=vmem, size = 0x1000, scoped, tag = 'scratch operand']
  %s0 = inlined_call_operand.vmem [shape: f32[8,128], index: 0, kind: input, shape index: {}]
  %s1 = inlined_call_operand.vmem [shape: f32[8,128], index: 1, kind: input, shape index: {}, may-alias: {1,8}]
  %s2 = inlined_call_operand.vmem [shape: f32[8,128], index: 2, kind: input, shape index: {}, may-alias: {2,9}]
  %s3 = inlined_call_operand.hbm [shape: bf16[256,512], index: 3, kind: input, shape index: {}]
  %s4 = inlined_call_operand.vmem [shape: f32[1,512], index: 4, kind: input, shape index: {}]
  %s5 = inlined_call_operand.hbm [shape: bf16[128,512], index: 5, kind: input, shape index: {}]
  %s6 = inlined_call_operand.vmem [shape: f32[1,512], index: 6, kind: input, shape index: {}]
  %s7 = inlined_call_operand.hbm [shape: f32[8,512], index: 7, kind: output, shape index: {0}]
  %s8 = inlined_call_operand.vmem [shape: f32[8,128], index: 8, kind: output, shape index: {1}, may-alias: {1,8}]
  %s9 = inlined_call_operand.vmem [shape: f32[8,128], index: 9, kind: output, shape index: {2}, may-alias: {2,9}]
  %10 = xla_tuple %s7, %s8, %s9
  %s11 = sld [smem:[#allocation0]]
  $region93: #{_lambda_.1} parent=0
    _
  %s13 = ssub.s32 1, %s11
  %s14 = scalar_select 0, %s13, %s11
  $region1: #{_lambda_.1} parent=0
    #allocation5 [shape = 'u8[262144]{0}', space=vmem, size = 0x40000, scoped, tag = 'input window, operand 3, single buffered']
    #allocation6 [shape = 's32[2]{0}', space=sflag, size = 0x8, scoped, tag = 'scoped memory for _lambda_.1']
    #allocation7 [shape = 's32[2]{0}', space=sflag, size = 0x8, scoped, tag = 'scoped memory for _lambda_.1']
    #allocation8 [shape = 'u8[65536]{0}', space=vmem, size = 0x10000, scoped, tag = 'input window, operand 5']
    #allocation9 [shape = 's32[2]{0}', space=sflag, size = 0x8, scoped, tag = 'scoped memory for _lambda_.1']
    #allocation10 [shape = 'u8[16384]{0}', space=vmem, size = 0x4000, scoped, tag = 'output window, operand 0, single buffered']
    %15 = vsyncpa [#allocation6], 0
    %16 = vsyncpa [#allocation9], 0
    %s17 = scalar_lea.sflag [#allocation9], 1
    %18 = vsyncpa %s17, 0
    %19 = vsyncpa [#allocation7], 0
    loop: start=0, step=1, limit=6
    $region2: #{_lambda_.1} parent=1 // loop_pre_header
      _
    $region3: #{_lambda_.1} parent=1 // loop_header
      %s21 = sphi 0, %s25
      %p22 = scmp.ge.s32.totalorder %s21, 6
      %s29 = sphi 0, %s29
      %s31 = sphi 0, %s29
      %s32 = sphi 0, %s31
      %s46 = sphi 0, %s32
      %s50 = sphi 0, %s50
      %s52 = sphi 0, %s50
      %s53 = sphi 0, %s52
      %s67 = sphi 0, %s53
      %s71 = sphi 0, %s71
      %s73 = sphi 0, %s71
      %s74 = sphi 0, %s73
      %s88 = sphi 0, %s74
      %s92 = sphi 0, %s92
      %s94 = sphi 0, %s92
      %s95 = sphi 0, %s94
      %s109 = sphi 0, %s95
      %s113 = sphi 0, %s113
      %s115 = sphi 0, %s113
      %s116 = sphi 0, %s115
      %s130 = sphi 0, %s116
      %s136 = sphi 0, %s138
      %s139 = sphi 0, %s136
      %s140 = sphi 0, %s139
      %s156 = sphi 0, %s140
      %s160 = sphi 0, %s160
      %s162 = sphi 0, %s160
      %s163 = sphi 0, %s162
      %s177 = sphi 0, %s163
      %s181 = sphi 0, %s181
      %s183 = sphi 0, %s181
      %s184 = sphi 0, %s183
      %s198 = sphi 0, %s184
      %s202 = sphi 0, %s202
      %s204 = sphi 0, %s202
      %s205 = sphi 0, %s204
      %s219 = sphi 0, %s205
      %s223 = sphi 0, %s223
      %s225 = sphi 0, %s223
      %s226 = sphi 0, %s225
      %s240 = sphi 0, %s226
    $region4: #{_lambda_.1} parent=1 // loop_header_branch
      %24 = sbr.rel (%p22) target = $region8
    $region5: #{_lambda_.1} parent=1 // loop_body
      %s26 = ssub.s32 %s21, 1
      %s27 = ssub.s32 %s21, 2
      %s28 = sadd.s32 %s21, 1
      %s30 = sadd.s32 %s29, 1
      %p33 = scmp.eq.s32.totalorder %s21, 3
      %p34 = scmp.ne.s32.totalorder %s29, %s31
      %p35 = scmp.eq.s32.totalorder %s21, 0
      %p36 = por %p34, %p35
      %p37 = scmp.ne.s32.totalorder %s29, %s31
      %p38 = scmp.eq.s32.totalorder %s26, 3
      %p39 = por %p37, %p38
      %p40 = scmp.ne.s32.totalorder %s31, %s32
      %p41 = scmp.eq.s32.totalorder %s26, 0
      %p42 = por %p40, %p41
      %p43 = scmp.ne.s32.totalorder %s31, %s32
      %p44 = scmp.eq.s32.totalorder %s27, 3
      %p45 = por %p43, %p44
      %p47 = scmp.ne.s32.totalorder %s32, %s46
      %p48 = scmp.eq.s32.totalorder %s27, 0
      %p49 = por %p47, %p48
      %s51 = sadd.s32 %s50, 1
      %p54 = scmp.eq.s32.totalorder %s21, 3
      %p55 = scmp.ne.s32.totalorder %s50, %s52
      %p56 = scmp.eq.s32.totalorder %s21, 0
      %p57 = por %p55, %p56
      %p58 = scmp.ne.s32.totalorder %s50, %s52
      %p59 = scmp.eq.s32.totalorder %s26, 3
      %p60 = por %p58, %p59
      %p61 = scmp.ne.s32.totalorder %s52, %s53
      %p62 = scmp.eq.s32.totalorder %s26, 0
      %p63 = por %p61, %p62
      %p64 = scmp.ne.s32.totalorder %s52, %s53
      %p65 = scmp.eq.s32.totalorder %s27, 3
      %p66 = por %p64, %p65
      %p68 = scmp.ne.s32.totalorder %s53, %s67
      %p69 = scmp.eq.s32.totalorder %s27, 0
      %p70 = por %p68, %p69
      %s72 = sadd.s32 %s71, 1
      %p75 = scmp.eq.s32.totalorder %s21, 3
      %p76 = scmp.ne.s32.totalorder %s71, %s73
      %p77 = scmp.eq.s32.totalorder %s21, 0
      %p78 = por %p76, %p77
      %p79 = scmp.ne.s32.totalorder %s71, %s73
      %p80 = scmp.eq.s32.totalorder %s26, 3
      %p81 = por %p79, %p80
      %p82 = scmp.ne.s32.totalorder %s73, %s74
      %p83 = scmp.eq.s32.totalorder %s26, 0
      %p84 = por %p82, %p83
      %p85 = scmp.ne.s32.totalorder %s73, %s74
      %p86 = scmp.eq.s32.totalorder %s27, 3
      %p87 = por %p85, %p86
      %p89 = scmp.ne.s32.totalorder %s74, %s88
      %p90 = scmp.eq.s32.totalorder %s27, 0
      %p91 = por %p89, %p90
      %s93 = sadd.s32 %s92, 1
      %p96 = scmp.eq.s32.totalorder %s21, 3
      %p97 = scmp.ne.s32.totalorder %s92, %s94
      %p98 = scmp.eq.s32.totalorder %s21, 0
      %p99 = por %p97, %p98
      %p100 = scmp.ne.s32.totalorder %s92, %s94
      %p101 = scmp.eq.s32.totalorder %s26, 3
      %p102 = por %p100, %p101
      %p103 = scmp.ne.s32.totalorder %s94, %s95
      %p104 = scmp.eq.s32.totalorder %s26, 0
      %p105 = por %p103, %p104
      %p106 = scmp.ne.s32.totalorder %s94, %s95
      %p107 = scmp.eq.s32.totalorder %s27, 3
      %p108 = por %p106, %p107
      %p110 = scmp.ne.s32.totalorder %s95, %s109
      %p111 = scmp.eq.s32.totalorder %s27, 0
      %p112 = por %p110, %p111
      %s114 = sadd.s32 %s113, 1
      %p117 = scmp.eq.s32.totalorder %s21, 3
      %p118 = scmp.ne.s32.totalorder %s113, %s115
      %p119 = scmp.eq.s32.totalorder %s21, 0
      %p120 = por %p118, %p119
      %p121 = scmp.ne.s32.totalorder %s113, %s115
      %p122 = scmp.eq.s32.totalorder %s26, 3
      %p123 = por %p121, %p122
      %p124 = scmp.ne.s32.totalorder %s115, %s116
      %p125 = scmp.eq.s32.totalorder %s26, 0
      %p126 = por %p124, %p125
      %p127 = scmp.ne.s32.totalorder %s115, %s116
      %p128 = scmp.eq.s32.totalorder %s27, 3
      %p129 = por %p127, %p128
      %p131 = scmp.ne.s32.totalorder %s116, %s130
      %p132 = scmp.eq.s32.totalorder %s27, 0
      %p133 = por %p131, %p132
      %s134 = ssub.s32 %s21, %s28
      %p135 = scmp.eq.s32.totalorder %s134, 0
      %s137 = sadd.s32 %s136, 1
      %s138 = scalar_select %p135, %s136, %s137
      %p141 = pneg %p135
      %p142 = scmp.eq.s32.totalorder %s21, 3
      %p143 = por %p141, %p142
      %p144 = scmp.ne.s32.totalorder %s136, %s139
      %p145 = scmp.eq.s32.totalorder %s21, 0
      %p146 = por %p144, %p145
      %p147 = scmp.ne.s32.totalorder %s136, %s139
      %p148 = scmp.eq.s32.totalorder %s26, 3
      %p149 = por %p147, %p148
      %p150 = scmp.ne.s32.totalorder %s139, %s140
      %p151 = scmp.eq.s32.totalorder %s26, 0
      %p152 = por %p150, %p151
      %p153 = scmp.ne.s32.totalorder %s139, %s140
      %p154 = scmp.eq.s32.totalorder %s27, 3
      %p155 = por %p153, %p154
      %p157 = scmp.ne.s32.totalorder %s140, %s156
      %p158 = scmp.eq.s32.totalorder %s27, 0
      %p159 = por %p157, %p158
      %s161 = sadd.s32 %s160, 1
      %p164 = scmp.eq.s32.totalorder %s21, 3
      %p165 = scmp.ne.s32.totalorder %s160, %s162
      %p166 = scmp.eq.s32.totalorder %s21, 0
      %p167 = por %p165, %p166
      %p168 = scmp.ne.s32.totalorder %s160, %s162
      %p169 = scmp.eq.s32.totalorder %s26, 3
      %p170 = por %p168, %p169
      %p171 = scmp.ne.s32.totalorder %s162, %s163
      %p172 = scmp.eq.s32.totalorder %s26, 0
      %p173 = por %p171, %p172
      %p174 = scmp.ne.s32.totalorder %s162, %s163
      %p175 = scmp.eq.s32.totalorder %s27, 3
      %p176 = por %p174, %p175
      %p178 = scmp.ne.s32.totalorder %s163, %s177
      %p179 = scmp.eq.s32.totalorder %s27, 0
      %p180 = por %p178, %p179
      %s182 = sadd.s32 %s181, 1
      %p185 = scmp.eq.s32.totalorder %s21, 3
      %p186 = scmp.ne.s32.totalorder %s181, %s183
      %p187 = scmp.eq.s32.totalorder %s21, 0
      %p188 = por %p186, %p187
      %p189 = scmp.ne.s32.totalorder %s181, %s183
      %p190 = scmp.eq.s32.totalorder %s26, 3
      %p191 = por %p189, %p190
      %p192 = scmp.ne.s32.totalorder %s183, %s184
      %p193 = scmp.eq.s32.totalorder %s26, 0
      %p194 = por %p192, %p193
      %p195 = scmp.ne.s32.totalorder %s183, %s184
      %p196 = scmp.eq.s32.totalorder %s27, 3
      %p197 = por %p195, %p196
      %p199 = scmp.ne.s32.totalorder %s184, %s198
      %p200 = scmp.eq.s32.totalorder %s27, 0
      %p201 = por %p199, %p200
      %s203 = sadd.s32 %s202, 1
      %p206 = scmp.eq.s32.totalorder %s21, 3
      %p207 = scmp.ne.s32.totalorder %s202, %s204
      %p208 = scmp.eq.s32.totalorder %s21, 0
      %p209 = por %p207, %p208
      %p210 = scmp.ne.s32.totalorder %s202, %s204
      %p211 = scmp.eq.s32.totalorder %s26, 3
      %p212 = por %p210, %p211
      %p213 = scmp.ne.s32.totalorder %s204, %s205
      %p214 = scmp.eq.s32.totalorder %s26, 0
      %p215 = por %p213, %p214
      %p216 = scmp.ne.s32.totalorder %s204, %s205
      %p217 = scmp.eq.s32.totalorder %s27, 3
      %p218 = por %p216, %p217
      %p220 = scmp.ne.s32.totalorder %s205, %s219
      %p221 = scmp.eq.s32.totalorder %s27, 0
      %p222 = por %p220, %p221
      %s224 = sadd.s32 %s223, 1
      %p227 = scmp.eq.s32.totalorder %s21, 3
      %p228 = scmp.ne.s32.totalorder %s223, %s225
      %p229 = scmp.eq.s32.totalorder %s21, 0
      %p230 = por %p228, %p229
      %p231 = scmp.ne.s32.totalorder %s223, %s225
      %p232 = scmp.eq.s32.totalorder %s26, 3
      %p233 = por %p231, %p232
      %p234 = scmp.ne.s32.totalorder %s225, %s226
      %p235 = scmp.eq.s32.totalorder %s26, 0
      %p236 = por %p234, %p235
      %p237 = scmp.ne.s32.totalorder %s225, %s226
      %p238 = scmp.eq.s32.totalorder %s27, 3
      %p239 = por %p237, %p238
      %p241 = scmp.ne.s32.totalorder %s226, %s240
      %p242 = scmp.eq.s32.totalorder %s27, 0
      %p243 = por %p241, %p242
      %p244 = scmp.le.s32.totalorder 1, %s21
      %p245 = scmp.lt.s32.totalorder %s21, 5
      %p246 = pnand %p244, %p245
      %p247 = pneg %p246
      // Predicated region
      $region9: #{_lambda_.1} parent=5 // pred_check
        _
      $region10: #{_lambda_.1} parent=5 // pred_check_branch
        %249 = sbr.rel (%p246) target = $region12
      $region11: #{_lambda_.1} parent=5 // pred_region
        %s250 = ssub.s32 %s21, 1
        // Predicated region
        $region13: #{_lambda_.1} parent=11 // pred_check
          %p251 = pneg %p42
        $region14: #{_lambda_.1} parent=11 // pred_check_branch
          %253 = sbr.rel (%p251) target = $region16
        $region15: #{_lambda_.1} parent=11 // pred_region
          _
        $region16: #{_lambda_.1} parent=11 // pred_fallthru
          _
        // Predicated region
        $region17: #{_lambda_.1} parent=11 // pred_check
          %p254 = pneg %p63
        $region18: #{_lambda_.1} parent=11 // pred_check_branch
          %256 = sbr.rel (%p254) target = $region20
        $region19: #{_lambda_.1} parent=11 // pred_region
          _
        $region20: #{_lambda_.1} parent=11 // pred_fallthru
          _
        // Predicated region
        $region21: #{_lambda_.1} parent=11 // pred_check
          %p257 = pneg %p84
        $region22: #{_lambda_.1} parent=11 // pred_check_branch
          %259 = sbr.rel (%p257) target = $region24
        $region23: #{_lambda_.1} parent=11 // pred_region
          _
        $region24: #{_lambda_.1} parent=11 // pred_fallthru
          _
        // Predicated region
        $region25: #{_lambda_.1} parent=11 // pred_check
          %p260 = pneg %p105
        $region26: #{_lambda_.1} parent=11 // pred_check_branch
          %262 = sbr.rel (%p260) target = $region28
        $region27: #{_lambda_.1} parent=11 // pred_region
          %s264 = ssub.s32 8192, 8192
          %265 = vsyncadd [#allocation6], %s264
          %s266 = sshll.u32 [#allocation5], 4
          %s267 = int_to_ptr.vmem [resolvable:$true] %s266
          %272 = dma.hbm_to_vmem [thread:$0]  %s3, 8192, %s267, [#allocation6], 256, 256, 16
        $region28: #{_lambda_.1} parent=11 // pred_fallthru
          _
        // Predicated region
        $region29: #{_lambda_.1} parent=11 // pred_check
          %p273 = pneg %p126
        $region30: #{_lambda_.1} parent=11 // pred_check_branch
          %275 = sbr.rel (%p273) target = $region32
        $region31: #{_lambda_.1} parent=11 // pred_region
          _
        $region32: #{_lambda_.1} parent=11 // pred_fallthru
          _
        // Predicated region
        $region33: #{_lambda_.1} parent=11 // pred_check
          %p276 = pneg %p173
        $region34: #{_lambda_.1} parent=11 // pred_check_branch
          %278 = sbr.rel (%p276) target = $region36
        $region35: #{_lambda_.1} parent=11 // pred_region
          _
        $region36: #{_lambda_.1} parent=11 // pred_fallthru
          _
      $region12: #{_lambda_.1} parent=5 // pred_fallthru
        _
      %p279 = scmp.lt.s32.totalorder %s21, 4
      // Predicated region
      $region37: #{_lambda_.1} parent=5 // pred_check
        %p280 = pneg %p279
      $region38: #{_lambda_.1} parent=5 // pred_check_branch
        %282 = sbr.rel (%p280) target = $region40
      $region39: #{_lambda_.1} parent=5 // pred_region
        // Predicated region
        $region41: #{_lambda_.1} parent=39 // pred_check
          %p283 = pneg %p146
        $region42: #{_lambda_.1} parent=39 // pred_check_branch
          %285 = sbr.rel (%p283) target = $region44
        $region43: #{_lambda_.1} parent=39 // pred_region
          %s286 = sand.u32 %s136, 1
          %s287 = scalar_lea.sflag [#allocation9], %s286
          %s288 = sand.u32 %s136, 1
          %s289 = smul.addr %s288, 64
          %s290 = scalar_lea.vmem [#allocation8], %s289
          %s292 = ssub.s32 1024, 1024
          %293 = vsyncadd %s287, %s292
          %s294 = smul.addr %s21, 64
          %s295 = scalar_lea.hbm %s5, %s294
          %s296 = sshll.u32 %s290, 4
          %s297 = int_to_ptr.vmem [resolvable:$true] %s296
          %302 = dma.hbm_to_vmem [thread:$0]  %s295, 1024, %s297, %s287, 256, 64, 4
        $region44: #{_lambda_.1} parent=39 // pred_fallthru
          _
      $region40: #{_lambda_.1} parent=5 // pred_fallthru
        _
      %p303 = scmp.le.s32.totalorder 1, %s21
      %p304 = scmp.lt.s32.totalorder %s21, 5
      %p305 = pnand %p303, %p304
      %p306 = pneg %p305
      // Predicated region
      $region45: #{_lambda_.1} parent=5 // pred_check
        _
      $region46: #{_lambda_.1} parent=5 // pred_check_branch
        %308 = sbr.rel (%p305) target = $region48
      $region47: #{_lambda_.1} parent=5 // pred_region
        %s309 = ssub.s32 %s21, 1
        // Predicated region
        $region49: #{_lambda_.1} parent=47 // pred_check
          %p310 = pneg %p105
        $region50: #{_lambda_.1} parent=47 // pred_check_branch
          %312 = sbr.rel (%p310) target = $region52
        $region51: #{_lambda_.1} parent=47 // pred_region
          %313 = dma.done [#allocation6], 8192
        $region52: #{_lambda_.1} parent=47 // pred_fallthru
          _
        %s314 = sand.u32 %s139, 1
        %s315 = scalar_lea.sflag [#allocation9], %s314
        %s316 = sand.u32 %s139, 1
        %s317 = smul.addr %s316, 64
        %s318 = scalar_lea.vmem [#allocation8], %s317
        // Predicated region
        $region53: #{_lambda_.1} parent=47 // pred_check
          %p319 = pneg %p152
        $region54: #{_lambda_.1} parent=47 // pred_check_branch
          %321 = sbr.rel (%p319) target = $region56
        $region55: #{_lambda_.1} parent=47 // pred_region
          %322 = dma.done %s315, 1024
        $region56: #{_lambda_.1} parent=47 // pred_fallthru
          _
        %p323 = pneg %p42
        %p324 = pneg %p39
        %p325 = pneg %p63
        %p326 = pneg %p60
        %p327 = pneg %p84
        %p328 = pneg %p81
        %p329 = pneg %p105
        %p330 = pneg %p102
        %p331 = pneg %p126
        %p332 = pneg %p123
        %s333 = sand.u32 %s139, 1
        %s334 = scalar_lea.sflag [#allocation9], %s333
        %s335 = sand.u32 %s139, 1
        %s336 = smul.addr %s335, 64
        %s337 = scalar_lea.vmem [#allocation8], %s336
        %p338 = pneg %p152
        %p339 = pneg %p149
        %p340 = pneg %p173
        %p341 = pneg %p170
        %p342 = pneg %p194
        %p343 = pneg %p191
        %p344 = pneg %p215
        %p345 = pneg %p212
        %p346 = pneg %p236
        %p347 = pneg %p233
        %p349 = scmp.eq.s32.totalorder %s26, 0
        // Predicated region
        $region57: #{_lambda_.1} parent=47 // pred_check
          %p350 = pneg %p349
        $region58: #{_lambda_.1} parent=47 // pred_check_branch
          %352 = sbr.rel (%p350) target = $region60
        $region59: #{_lambda_.1} parent=47 // pred_region
          %v353 = vld [vmem:[%s0] sm:$0xff]
          %v354 = vpack.c.bf16 %v353, %v353
          %v355 = vld [vmem:[%s1] sm:$0xff]
          %v356 = vpack.c.bf16 %v355, %v355
          %v357 = vld [vmem:[#allocation5] sm:$0xff]
          %v358 = vld [vmem:[#allocation5 + $0x8] sm:$0xff]
          %v359 = vld [vmem:[#allocation5 + $0x10] sm:$0xff]
          %v360 = vld [vmem:[#allocation5 + $0x18] sm:$0xff]
          %v361 = vld [vmem:[#allocation5 + $0x20] sm:$0xff]
          %v362 = vld [vmem:[#allocation5 + $0x28] sm:$0xff]
          %v363 = vld [vmem:[#allocation5 + $0x30] sm:$0xff]
          %v364 = vld [vmem:[#allocation5 + $0x38] sm:$0xff]
          %v365 = vld [vmem:[#allocation5 + $0x40] sm:$0xff]
          %v366 = vld [vmem:[#allocation5 + $0x48] sm:$0xff]
          %v367 = vld [vmem:[#allocation5 + $0x50] sm:$0xff]
          %v368 = vld [vmem:[#allocation5 + $0x58] sm:$0xff]
          %v369 = vld [vmem:[#allocation5 + $0x60] sm:$0xff]
          %v370 = vld [vmem:[#allocation5 + $0x68] sm:$0xff]
          %v371 = vld [vmem:[#allocation5 + $0x70] sm:$0xff]
          %v372 = vld [vmem:[#allocation5 + $0x78] sm:$0xff]
          %v373 = vld [vmem:[#allocation5 + $0x80] sm:$0xff]
          %v374 = vld [vmem:[#allocation5 + $0x88] sm:$0xff]
          %v375 = vld [vmem:[#allocation5 + $0x90] sm:$0xff]
          %v376 = vld [vmem:[#allocation5 + $0x98] sm:$0xff]
          %v377 = vld [vmem:[#allocation5 + $0xa0] sm:$0xff]
          %v378 = vld [vmem:[#allocation5 + $0xa8] sm:$0xff]
          %v379 = vld [vmem:[#allocation5 + $0xb0] sm:$0xff]
          %v380 = vld [vmem:[#allocation5 + $0xb8] sm:$0xff]
          %v381 = vld [vmem:[#allocation5 + $0xc0] sm:$0xff]
          %v382 = vld [vmem:[#allocation5 + $0xc8] sm:$0xff]
          %v383 = vld [vmem:[#allocation5 + $0xd0] sm:$0xff]
          %v384 = vld [vmem:[#allocation5 + $0xd8] sm:$0xff]
          %v385 = vld [vmem:[#allocation5 + $0xe0] sm:$0xff]
          %v386 = vld [vmem:[#allocation5 + $0xe8] sm:$0xff]
          %v387 = vld [vmem:[#allocation5 + $0xf0] sm:$0xff]
          %v388 = vld [vmem:[#allocation5 + $0xf8] sm:$0xff]
          %v389 = vld [vmem:[#allocation5 + $0x100] sm:$0xff]
          %v390 = vld [vmem:[#allocation5 + $0x108] sm:$0xff]
          %v391 = vld [vmem:[#allocation5 + $0x110] sm:$0xff]
          %v392 = vld [vmem:[#allocation5 + $0x118] sm:$0xff]
          %v393 = vld [vmem:[#allocation5 + $0x120] sm:$0xff]
          %v394 = vld [vmem:[#allocation5 + $0x128] sm:$0xff]
          %v395 = vld [vmem:[#allocation5 + $0x130] sm:$0xff]
          %v396 = vld [vmem:[#allocation5 + $0x138] sm:$0xff]
          %v397 = vld [vmem:[#allocation5 + $0x140] sm:$0xff]
          %v398 = vld [vmem:[#allocation5 + $0x148] sm:$0xff]
          %v399 = vld [vmem:[#allocation5 + $0x150] sm:$0xff]
          %v400 = vld [vmem:[#allocation5 + $0x158] sm:$0xff]
          %v401 = vld [vmem:[#allocation5 + $0x160] sm:$0xff]
          %v402 = vld [vmem:[#allocation5 + $0x168] sm:$0xff]
          %v403 = vld [vmem:[#allocation5 + $0x170] sm:$0xff]
          %v404 = vld [vmem:[#allocation5 + $0x178] sm:$0xff]
          %v405 = vld [vmem:[#allocation5 + $0x180] sm:$0xff]
          %v406 = vld [vmem:[#allocation5 + $0x188] sm:$0xff]
          %v407 = vld [vmem:[#allocation5 + $0x190] sm:$0xff]
          %v408 = vld [vmem:[#allocation5 + $0x198] sm:$0xff]
          %v409 = vld [vmem:[#allocation5 + $0x1a0] sm:$0xff]
          %v410 = vld [vmem:[#allocation5 + $0x1a8] sm:$0xff]
          %v411 = vld [vmem:[#allocation5 + $0x1b0] sm:$0xff]
          %v412 = vld [vmem:[#allocation5 + $0x1b8] sm:$0xff]
          %v413 = vld [vmem:[#allocation5 + $0x1c0] sm:$0xff]
          %v414 = vld [vmem:[#allocation5 + $0x1c8] sm:$0xff]
          %v415 = vld [vmem:[#allocation5 + $0x1d0] sm:$0xff]
          %v416 = vld [vmem:[#allocation5 + $0x1d8] sm:$0xff]
          %v417 = vld [vmem:[#allocation5 + $0x1e0] sm:$0xff]
          %v418 = vld [vmem:[#allocation5 + $0x1e8] sm:$0xff]
          %v419 = vld [vmem:[#allocation5 + $0x1f0] sm:$0xff]
          %v420 = vld [vmem:[#allocation5 + $0x1f8] sm:$0xff]
          %v421 = vld [vmem:[%s4] sm:$0xf]
          %v423 = vlaneseq
          %v424 = vshrl.u32 %v423, 7
          %v425 = vsub.s32 0, %v424
          %v426 = vrot.slane %v421, %v425
          %v427 = vlaneseq
          %v428 = vshrl.u32 %v427, 7
          %v429 = vsub.s32 1, %v428
          %v430 = vrot.slane %v421, %v429
          %v431 = vlaneseq
          %v432 = vshrl.u32 %v431, 7
          %v433 = vsub.s32 2, %v432
          %v434 = vrot.slane %v421, %v433
          %v435 = vlaneseq
          %v436 = vshrl.u32 %v435, 7
          %v437 = vsub.s32 3, %v436
          %v438 = vrot.slane %v421, %v437
          %v507 = vunpack.c.l.b16 %v357
          %v508 = vunpack.c.h.b16 %v357
          %v509 = vunpack.c.l.b16 %v358
          %v510 = vunpack.c.h.b16 %v358
          %v511 = vunpack.c.l.b16 %v359
          %v512 = vunpack.c.h.b16 %v359
          %v513 = vunpack.c.l.b16 %v360
          %v514 = vunpack.c.h.b16 %v360
          %v515 = vunpack.c.l.b16 %v361
          %v516 = vunpack.c.h.b16 %v361
          %v517 = vunpack.c.l.b16 %v362
          %v518 = vunpack.c.h.b16 %v362
          %v519 = vunpack.c.l.b16 %v363
          %v520 = vunpack.c.h.b16 %v363
          %v521 = vunpack.c.l.b16 %v364
          %v522 = vunpack.c.h.b16 %v364
          %v523 = vunpack.c.l.b16 %v365
          %v524 = vunpack.c.h.b16 %v365
          %v525 = vunpack.c.l.b16 %v366
          %v526 = vunpack.c.h.b16 %v366
          %v527 = vunpack.c.l.b16 %v367
          %v528 = vunpack.c.h.b16 %v367
          %v529 = vunpack.c.l.b16 %v368
          %v530 = vunpack.c.h.b16 %v368
          %v531 = vunpack.c.l.b16 %v369
          %v532 = vunpack.c.h.b16 %v369
          %v533 = vunpack.c.l.b16 %v370
          %v534 = vunpack.c.h.b16 %v370
          %v535 = vunpack.c.l.b16 %v371
          %v536 = vunpack.c.h.b16 %v371
          %v537 = vunpack.c.l.b16 %v372
          %v538 = vunpack.c.h.b16 %v372
          %v539 = vunpack.c.l.b16 %v373
          %v540 = vunpack.c.h.b16 %v373
          %v541 = vunpack.c.l.b16 %v374
          %v542 = vunpack.c.h.b16 %v374
          %v543 = vunpack.c.l.b16 %v375
          %v544 = vunpack.c.h.b16 %v375
          %v545 = vunpack.c.l.b16 %v376
          %v546 = vunpack.c.h.b16 %v376
          %v547 = vunpack.c.l.b16 %v377
          %v548 = vunpack.c.h.b16 %v377
          %v549 = vunpack.c.l.b16 %v378
          %v550 = vunpack.c.h.b16 %v378
          %v551 = vunpack.c.l.b16 %v379
          %v552 = vunpack.c.h.b16 %v379
          %v553 = vunpack.c.l.b16 %v380
          %v554 = vunpack.c.h.b16 %v380
          %v555 = vunpack.c.l.b16 %v381
          %v556 = vunpack.c.h.b16 %v381
          %v557 = vunpack.c.l.b16 %v382
          %v558 = vunpack.c.h.b16 %v382
          %v559 = vunpack.c.l.b16 %v383
          %v560 = vunpack.c.h.b16 %v383
          %v561 = vunpack.c.l.b16 %v384
          %v562 = vunpack.c.h.b16 %v384
          %v563 = vunpack.c.l.b16 %v385
          %v564 = vunpack.c.h.b16 %v385
          %v565 = vunpack.c.l.b16 %v386
          %v566 = vunpack.c.h.b16 %v386
          %v567 = vunpack.c.l.b16 %v387
          %v568 = vunpack.c.h.b16 %v387
          %v569 = vunpack.c.l.b16 %v388
          %v570 = vunpack.c.h.b16 %v388
          %v571 = vunpack.c.l.b16 %v389
          %v572 = vunpack.c.h.b16 %v389
          %v573 = vunpack.c.l.b16 %v390
          %v574 = vunpack.c.h.b16 %v390
          %v575 = vunpack.c.l.b16 %v391
          %v576 = vunpack.c.h.b16 %v391
          %v577 = vunpack.c.l.b16 %v392
          %v578 = vunpack.c.h.b16 %v392
          %v579 = vunpack.c.l.b16 %v393
          %v580 = vunpack.c.h.b16 %v393
          %v581 = vunpack.c.l.b16 %v394
          %v582 = vunpack.c.h.b16 %v394
          %v583 = vunpack.c.l.b16 %v395
          %v584 = vunpack.c.h.b16 %v395
          %v585 = vunpack.c.l.b16 %v396
          %v586 = vunpack.c.h.b16 %v396
          %v587 = vunpack.c.l.b16 %v397
          %v588 = vunpack.c.h.b16 %v397
          %v589 = vunpack.c.l.b16 %v398
          %v590 = vunpack.c.h.b16 %v398
          %v591 = vunpack.c.l.b16 %v399
          %v592 = vunpack.c.h.b16 %v399
          %v593 = vunpack.c.l.b16 %v400
          %v594 = vunpack.c.h.b16 %v400
          %v595 = vunpack.c.l.b16 %v401
          %v596 = vunpack.c.h.b16 %v401
          %v597 = vunpack.c.l.b16 %v402
          %v598 = vunpack.c.h.b16 %v402
          %v599 = vunpack.c.l.b16 %v403
          %v600 = vunpack.c.h.b16 %v403
          %v601 = vunpack.c.l.b16 %v404
          %v602 = vunpack.c.h.b16 %v404
          %v603 = vunpack.c.l.b16 %v405
          %v604 = vunpack.c.h.b16 %v405
          %v605 = vunpack.c.l.b16 %v406
          %v606 = vunpack.c.h.b16 %v406
          %v607 = vunpack.c.l.b16 %v407
          %v608 = vunpack.c.h.b16 %v407
          %v609 = vunpack.c.l.b16 %v408
          %v610 = vunpack.c.h.b16 %v408
          %v611 = vunpack.c.l.b16 %v409
          %v612 = vunpack.c.h.b16 %v409
          %v613 = vunpack.c.l.b16 %v410
          %v614 = vunpack.c.h.b16 %v410
          %v615 = vunpack.c.l.b16 %v411
          %v616 = vunpack.c.h.b16 %v411
          %v617 = vunpack.c.l.b16 %v412
          %v618 = vunpack.c.h.b16 %v412
          %v619 = vunpack.c.l.b16 %v413
          %v620 = vunpack.c.h.b16 %v413
          %v621 = vunpack.c.l.b16 %v414
          %v622 = vunpack.c.h.b16 %v414
          %v623 = vunpack.c.l.b16 %v415
          %v624 = vunpack.c.h.b16 %v415
          %v625 = vunpack.c.l.b16 %v416
          %v626 = vunpack.c.h.b16 %v416
          %v627 = vunpack.c.l.b16 %v417
          %v628 = vunpack.c.h.b16 %v417
          %v629 = vunpack.c.l.b16 %v418
          %v630 = vunpack.c.h.b16 %v418
          %v631 = vunpack.c.l.b16 %v419
          %v632 = vunpack.c.h.b16 %v419
          %v633 = vunpack.c.l.b16 %v420
          %v634 = vunpack.c.h.b16 %v420
          %v635 = vpack.c.b16 %v511, %v507
          %v636 = vpack.c.b16 %v512, %v508
          %v637 = vpack.c.b16 %v513, %v509
          %v638 = vpack.c.b16 %v514, %v510
          %v639 = vpack.c.b16 %v519, %v515
          %v640 = vpack.c.b16 %v520, %v516
          %v641 = vpack.c.b16 %v521, %v517
          %v642 = vpack.c.b16 %v522, %v518
          %v643 = vpack.c.b16 %v527, %v523
          %v644 = vpack.c.b16 %v528, %v524
          %v645 = vpack.c.b16 %v529, %v525
          %v646 = vpack.c.b16 %v530, %v526
          %v647 = vpack.c.b16 %v535, %v531
          %v648 = vpack.c.b16 %v536, %v532
          %v649 = vpack.c.b16 %v537, %v533
          %v650 = vpack.c.b16 %v538, %v534
          %v651 = vpack.c.b16 %v543, %v539
          %v652 = vpack.c.b16 %v544, %v540
          %v653 = vpack.c.b16 %v545, %v541
          %v654 = vpack.c.b16 %v546, %v542
          %v655 = vpack.c.b16 %v551, %v547
          %v656 = vpack.c.b16 %v552, %v548
          %v657 = vpack.c.b16 %v553, %v549
          %v658 = vpack.c.b16 %v554, %v550
          %v659 = vpack.c.b16 %v559, %v555
          %v660 = vpack.c.b16 %v560, %v556
          %v661 = vpack.c.b16 %v561, %v557
          %v662 = vpack.c.b16 %v562, %v558
          %v663 = vpack.c.b16 %v567, %v563
          %v664 = vpack.c.b16 %v568, %v564
          %v665 = vpack.c.b16 %v569, %v565
          %v666 = vpack.c.b16 %v570, %v566
          %v667 = vpack.c.b16 %v575, %v571
          %v668 = vpack.c.b16 %v576, %v572
          %v669 = vpack.c.b16 %v577, %v573
          %v670 = vpack.c.b16 %v578, %v574
          %v671 = vpack.c.b16 %v583, %v579
          %v672 = vpack.c.b16 %v584, %v580
          %v673 = vpack.c.b16 %v585, %v581
          %v674 = vpack.c.b16 %v586, %v582
          %v675 = vpack.c.b16 %v591, %v587
          %v676 = vpack.c.b16 %v592, %v588
          %v677 = vpack.c.b16 %v593, %v589
          %v678 = vpack.c.b16 %v594, %v590
          %v679 = vpack.c.b16 %v599, %v595
          %v680 = vpack.c.b16 %v600, %v596
          %v681 = vpack.c.b16 %v601, %v597
          %v682 = vpack.c.b16 %v602, %v598
          %v683 = vpack.c.b16 %v607, %v603
          %v684 = vpack.c.b16 %v608, %v604
          %v685 = vpack.c.b16 %v609, %v605
          %v686 = vpack.c.b16 %v610, %v606
          %v687 = vpack.c.b16 %v615, %v611
          %v688 = vpack.c.b16 %v616, %v612
          %v689 = vpack.c.b16 %v617, %v613
          %v690 = vpack.c.b16 %v618, %v614
          %v691 = vpack.c.b16 %v623, %v619
          %v692 = vpack.c.b16 %v624, %v620
          %v693 = vpack.c.b16 %v625, %v621
          %v694 = vpack.c.b16 %v626, %v622
          %v695 = vpack.c.b16 %v631, %v627
          %v696 = vpack.c.b16 %v632, %v628
          %v697 = vpack.c.b16 %v633, %v629
          %v698 = vpack.c.b16 %v634, %v630
          %763 = vmatprep.subr.bf16.mxu0 %v636
          %764 = vmatpush1.bf16.msra.mxu0 %v635
          %765 = vmatprep.subr.bf16.mxu0 %v640
          %766 = vmatpush1.bf16.msra.mxu0 %v639
          %767 = vmatprep.subr.bf16.mxu0 %v644
          %768 = vmatpush1.bf16.msra.mxu0 %v643
          %769 = vmatprep.subr.bf16.mxu0 %v648
          %770 = vmatpush1.bf16.msra.mxu0 %v647
          %771 = vmatprep.subr.bf16.mxu0 %v652
          %772 = vmatpush1.bf16.msra.mxu0 %v651
          %773 = vmatprep.subr.bf16.mxu0 %v656
          %774 = vmatpush1.bf16.msra.mxu0 %v655
          %775 = vmatprep.subr.bf16.mxu0 %v660
          %776 = vmatpush1.bf16.msra.mxu0 %v659
          %777 = vmatprep.subr.bf16.mxu0 %v664
          %778 = vmatpush1.bf16.msra.mxu0 %v663
          %779 = vmatprep.subr.bf16.mxu0 %v668
          %780 = vmatpush1.bf16.msra.mxu0 %v667
          %781 = vmatprep.subr.bf16.mxu0 %v672
          %782 = vmatpush1.bf16.msra.mxu0 %v671
          %783 = vmatprep.subr.bf16.mxu0 %v676
          %784 = vmatpush1.bf16.msra.mxu0 %v675
          %785 = vmatprep.subr.bf16.mxu0 %v680
          %786 = vmatpush1.bf16.msra.mxu0 %v679
          %787 = vmatprep.subr.bf16.mxu0 %v684
          %788 = vmatpush1.bf16.msra.mxu0 %v683
          %789 = vmatprep.subr.bf16.mxu0 %v688
          %790 = vmatpush1.bf16.msra.mxu0 %v687
          %791 = vmatprep.subr.bf16.mxu0 %v692
          %792 = vmatpush1.bf16.msra.mxu0 %v691
          %793 = vmatprep.subr.bf16.mxu0 %v696
          %794 = vmatpush1.bf16.msra.mxu0 %v695
          %795 = vmatprep.mubr.bf16.mxu0 %v356
          %796 = vmatmul.mubr.bf16.gmra.mrb[0].mxu0 %v354
          %v797 = vpop.f32.mrb[0].mxu0
          %v798 = vadd.f32 %v426, %v797
          %v799 = vpop.f32.mrb[0].mxu0
          %v800 = vadd.f32 %v430, %v799
          %v801 = vpop.f32.mrb[0].mxu0
          %v802 = vpop.f32.mrb[0].mxu0
          %803 = vdwg.mxu0
          %804 = vmatprep.subr.bf16.mxu0 %v638
          %805 = vmatpush1.bf16.msra.mxu0 %v637
          %806 = vmatprep.subr.bf16.mxu0 %v642
          %807 = vmatpush1.bf16.msra.mxu0 %v641
          %808 = vmatprep.subr.bf16.mxu0 %v646
          %809 = vmatpush1.bf16.msra.mxu0 %v645
          %810 = vmatprep.subr.bf16.mxu0 %v650
          %811 = vmatpush1.bf16.msra.mxu0 %v649
          %812 = vmatprep.subr.bf16.mxu0 %v654
          %813 = vmatpush1.bf16.msra.mxu0 %v653
          %814 = vmatprep.subr.bf16.mxu0 %v658
          %815 = vmatpush1.bf16.msra.mxu0 %v657
          %816 = vmatprep.subr.bf16.mxu0 %v662
          %817 = vmatpush1.bf16.msra.mxu0 %v661
          %818 = vmatprep.subr.bf16.mxu0 %v666
          %819 = vmatpush1.bf16.msra.mxu0 %v665
          %820 = vmatprep.subr.bf16.mxu0 %v670
          %821 = vmatpush1.bf16.msra.mxu0 %v669
          %822 = vmatprep.subr.bf16.mxu0 %v674
          %823 = vmatpush1.bf16.msra.mxu0 %v673
          %824 = vmatprep.subr.bf16.mxu0 %v678
          %825 = vmatpush1.bf16.msra.mxu0 %v677
          %826 = vmatprep.subr.bf16.mxu0 %v682
          %827 = vmatpush1.bf16.msra.mxu0 %v681
          %828 = vmatprep.subr.bf16.mxu0 %v686
          %829 = vmatpush1.bf16.msra.mxu0 %v685
          %830 = vmatprep.subr.bf16.mxu0 %v690
          %831 = vmatpush1.bf16.msra.mxu0 %v689
          %832 = vmatprep.subr.bf16.mxu0 %v694
          %833 = vmatpush1.bf16.msra.mxu0 %v693
          %834 = vmatprep.subr.bf16.mxu0 %v698
          %835 = vmatpush1.bf16.msra.mxu0 %v697
          %836 = vmatprep.mubr.bf16.mxu0 %v356
          %837 = vmatmul.mubr.bf16.gmra.mrb[0].mxu0 %v354
          %v838 = vpop.f32.mrb[0].mxu0
          %v839 = vadd.f32 %v434, %v838
          %v840 = vpop.f32.mrb[0].mxu0
          %v841 = vadd.f32 %v438, %v840
          %v842 = vpop.f32.mrb[0].mxu0
          %v843 = vpop.f32.mrb[0].mxu0
          %844 = vdwg.mxu0
          %v845 = vxor.u32 %v798, 2147483648
          %v846 = vmul.f32 %v845, 1.442695
          %v847 = vpow.pop %v846
          %v848 = vadd.f32 %v847, 1.0
          %v849 = vrcp.pop %v848
          %v850 = vmul.f32 1.0, %v849
          %v851 = vxor.u32 %v800, 2147483648
          %v852 = vmul.f32 %v851, 1.442695
          %v853 = vpow.pop %v852
          %v854 = vadd.f32 %v853, 1.0
          %v855 = vrcp.pop %v854
          %v856 = vmul.f32 1.0, %v855
          %v857 = vtanh.pop %v839
          %v858 = vxor.u32 %v841, 2147483648
          %v859 = vmul.f32 %v858, 1.442695
          %v860 = vpow.pop %v859
          %v861 = vadd.f32 %v860, 1.0
          %v862 = vrcp.pop %v861
          %v863 = vmul.f32 1.0, %v862
          %v864 = vld [vmem:[%s2] sm:$0xff]
          %v865 = vmul.f32 %v856, %v864
          %v866 = vmul.f32 %v850, %v857
          %v867 = vadd.f32 %v865, %v866
          %v868 = vtanh.pop %v867
          %v869 = vmul.f32 %v863, %v868
          %870 = vst [vmem:[%s9] sm:$0xff] %v867
          %871 = vst [vmem:[%s8] sm:$0xff] %v869
          %v872 = vpack.c.bf16 %v869, %v869
          %873 = vst [vmem:[#allocation2] sm:$0xf] %v872
          %vm874 = vcmask 7168
          %875 = vst.msk [vmem:[#allocation3] sm:$0xff] %vm874, -inf
          %876 = vst.msk [vmem:[#allocation4] sm:$0xff] %vm874, 0.0
        $region60: #{_lambda_.1} parent=47 // pred_fallthru
          _
        %s877 = smul.u32 %s26, 128
        %v878 = vld [vmem:[#allocation2] sm:$0xf]
        %v879 = vld [vmem:[%s318] sm:$0xf]
        %v880 = vld [vmem:[%s318 + $0x4] sm:$0xf]
        %v881 = vld [vmem:[%s318 + $0x8] sm:$0xf]
        %v882 = vld [vmem:[%s318 + $0xc] sm:$0xf]
        %v883 = vld [vmem:[%s318 + $0x10] sm:$0xf]
        %v884 = vld [vmem:[%s318 + $0x14] sm:$0xf]
        %v885 = vld [vmem:[%s318 + $0x18] sm:$0xf]
        %v886 = vld [vmem:[%s318 + $0x1c] sm:$0xf]
        %v887 = vld [vmem:[%s318 + $0x20] sm:$0xf]
        %v888 = vld [vmem:[%s318 + $0x24] sm:$0xf]
        %v889 = vld [vmem:[%s318 + $0x28] sm:$0xf]
        %v890 = vld [vmem:[%s318 + $0x2c] sm:$0xf]
        %v891 = vld [vmem:[%s318 + $0x30] sm:$0xf]
        %v892 = vld [vmem:[%s318 + $0x34] sm:$0xf]
        %v893 = vld [vmem:[%s318 + $0x38] sm:$0xf]
        %v894 = vld [vmem:[%s318 + $0x3c] sm:$0xf]
        %s895 = sshra.s32 %s877, 7
        %s896 = sand.u32 %s877, 127
        %s897 = scalar_lea.vmem %s6, %s895
        %v898 = vld [vmem:[%s897] sm:$0x1]
        %v900 = vlaneseq
        %v901 = vshrl.u32 %v900, 7
        %v902 = vsub.s32 0, %v901
        %v903 = vrot.slane %v898, %v902
        %v921 = vunpack.c.l.b16 %v879
        %v922 = vunpack.c.l.b16 %v880
        %v923 = vunpack.c.l.b16 %v881
        %v924 = vunpack.c.l.b16 %v882
        %v925 = vunpack.c.l.b16 %v883
        %v926 = vunpack.c.l.b16 %v884
        %v927 = vunpack.c.l.b16 %v885
        %v928 = vunpack.c.l.b16 %v886
        %v929 = vunpack.c.l.b16 %v887
        %v930 = vunpack.c.l.b16 %v888
        %v931 = vunpack.c.l.b16 %v889
        %v932 = vunpack.c.l.b16 %v890
        %v933 = vunpack.c.l.b16 %v891
        %v934 = vunpack.c.l.b16 %v892
        %v935 = vunpack.c.l.b16 %v893
        %v936 = vunpack.c.l.b16 %v894
        %v937 = vpack.c.b16 %v922, %v921
        %v938 = vpack.c.b16 %v924, %v923
        %v939 = vpack.c.b16 %v926, %v925
        %v940 = vpack.c.b16 %v928, %v927
        %v941 = vpack.c.b16 %v930, %v929
        %v942 = vpack.c.b16 %v932, %v931
        %v943 = vpack.c.b16 %v934, %v933
        %v944 = vpack.c.b16 %v936, %v935
        %953 = vmatprep.subr.bf16.mxu0 0
        %954 = vmatpush1.bf16.msra.mxu0 %v937
        %955 = vmatprep.subr.bf16.mxu0 0
        %956 = vmatpush1.bf16.msra.mxu0 %v938
        %957 = vmatprep.subr.bf16.mxu0 0
        %958 = vmatpush1.bf16.msra.mxu0 %v939
        %959 = vmatprep.subr.bf16.mxu0 0
        %960 = vmatpush1.bf16.msra.mxu0 %v940
        %961 = vmatprep.subr.bf16.mxu0 0
        %962 = vmatpush1.bf16.msra.mxu0 %v941
        %963 = vmatprep.subr.bf16.mxu0 0
        %964 = vmatpush1.bf16.msra.mxu0 %v942
        %965 = vmatprep.subr.bf16.mxu0 0
        %966 = vmatpush1.bf16.msra.mxu0 %v943
        %967 = vmatprep.subr.bf16.mxu0 0
        %968 = vmatpush1.bf16.msra.mxu0 %v944
        %969 = vmatprep.subr.bf16.mxu0 0
        %970 = vmatpush1.bf16.msra.mxu0 0
        %971 = vmatprep.subr.bf16.mxu0 0
        %972 = vmatpush1.bf16.msra.mxu0 0
        %973 = vmatprep.subr.bf16.mxu0 0
        %974 = vmatpush1.bf16.msra.mxu0 0
        %975 = vmatprep.subr.bf16.mxu0 0
        %976 = vmatpush1.bf16.msra.mxu0 0
        %977 = vmatprep.subr.bf16.mxu0 0
        %978 = vmatpush1.bf16.msra.mxu0 0
        %979 = vmatprep.subr.bf16.mxu0 0
        %980 = vmatpush1.bf16.msra.mxu0 0
        %981 = vmatprep.subr.bf16.mxu0 0
        %982 = vmatpush1.bf16.msra.mxu0 0
        %983 = vmatprep.subr.bf16.mxu0 0
        %984 = vmatpush1.bf16.msra.mxu0 0
        %985 = vmatprep.mubr.bf16.mxu0 0
        %986 = vmatmul.mubr.bf16.gmra.mrb[0].mxu0 %v878
        %v987 = vpop.f32.mrb[0].mxu0
        %v988 = vadd.f32 %v903, %v987
        %v989 = vpop.f32.mrb[0].mxu0
        %v990 = vpop.f32.mrb[0].mxu0
        %v991 = vpop.f32.mrb[0].mxu0
        %992 = vdwg.mxu0
        %s993 = smul.addr %s895, 8
        %s994 = scalar_lea.vmem [#allocation10], %s993
        %995 = vst [vmem:[%s994] sm:$0xff] %v988
        %v996 = vld [vmem:[#allocation3] sm:$0xff]
        %997 = vmax.xlane.f32.xlu0 %v988
        %v998 = vpop.xlane.xlu0 %997
        %v999 = vmax.f32 %v996, %v998
        %v1000 = vld [vmem:[#allocation4] sm:$0xff]
        %v1001 = vsub.f32 %v996, %v999
        %v1002 = vmul.f32 %v1001, 1.442695
        %v1003 = vpow.pop %v1002
        %v1004 = vmul.f32 %v1000, %v1003
        %1006 = vset.pattern.permute.xlu0 0
        %1007 = vperm.xlu0 %1006, %v999
        %v1008 = vpop.permute.xlu0 %1007
        %v1010 = vsub.f32 %v988, %v1008
        %v1011 = vmul.f32 %v1010, 1.442695
        %v1012 = vpow.pop %v1011
        %1013 = vadd.xlane.f32.xlu0 %v1012
        %v1014 = vpop.xlane.xlu0 %1013
        %v1015 = vadd.f32 %v1004, %v1014
        %vm1016 = vcmask 7168
        %1017 = vst.msk [vmem:[#allocation4] sm:$0xff] %vm1016, %v1015
        %1018 = vst.msk [vmem:[#allocation3] sm:$0xff] %vm1016, %v999
        %p1019 = scmp.eq.s32.totalorder %s26, 3
        // Predicated region
        $region61: #{_lambda_.1} parent=47 // pred_check
          %p1020 = pneg %p1019
        $region62: #{_lambda_.1} parent=47 // pred_check_branch
          %1022 = sbr.rel (%p1020) target = $region64
        $region63: #{_lambda_.1} parent=47 // pred_region
          %v1023 = vld [vmem:[#allocation10] sm:$0xff]
          %v1024 = vld [vmem:[#allocation10 + $0x8] sm:$0xff]
          %v1025 = vld [vmem:[#allocation10 + $0x10] sm:$0xff]
          %v1026 = vld [vmem:[#allocation10 + $0x18] sm:$0xff]
          %v1027 = vld [vmem:[#allocation3] sm:$0xff]
          %v1028 = vld [vmem:[#allocation4] sm:$0xff]
          %v1029 = vlog2.pop %v1028
          %v1030 = vmul.f32 %v1029, 0.6931472
          %v1031 = vadd.f32 %v1027, %v1030
          %1033 = vset.pattern.permute.xlu0 0
          %1034 = vperm.xlu0 %1033, %v1031
          %v1035 = vpop.permute.xlu0 %1034
          %v1037 = vsub.f32 %v1023, %v1035
          %v1038 = vsub.f32 %v1024, %v1035
          %v1039 = vsub.f32 %v1025, %v1035
          %v1040 = vsub.f32 %v1026, %v1035
          %1041 = vst [vmem:[#allocation10] sm:$0xff] %v1037
          %1042 = vst [vmem:[#allocation10 + $0x8] sm:$0xff] %v1038
          %1043 = vst [vmem:[#allocation10 + $0x10] sm:$0xff] %v1039
          %1044 = vst [vmem:[#allocation10 + $0x18] sm:$0xff] %v1040
        $region64: #{_lambda_.1} parent=47 // pred_fallthru
          _
        // Predicated region
        $region65: #{_lambda_.1} parent=47 // pred_check
          %p1045 = pneg %p191
        $region66: #{_lambda_.1} parent=47 // pred_check_branch
          %1047 = sbr.rel (%p1045) target = $region68
        $region67: #{_lambda_.1} parent=47 // pred_region
          %s1049 = ssub.s32 512, 512
          %1050 = vsyncadd [#allocation7], %s1049
          %s1052 = sshll.u32 [#allocation10], 4
          %s1053 = int_to_ptr.vmem [resolvable:$true] %s1052
          %1055 = dma.vmem_to_hbm [thread:$0]  %s1053, 512, %s7, [#allocation7]
        $region68: #{_lambda_.1} parent=47 // pred_fallthru
          _
        // Predicated region
        $region69: #{_lambda_.1} parent=47 // pred_check
          %p1056 = pneg %p212
        $region70: #{_lambda_.1} parent=47 // pred_check_branch
          %1058 = sbr.rel (%p1056) target = $region72
        $region71: #{_lambda_.1} parent=47 // pred_region
          _
        $region72: #{_lambda_.1} parent=47 // pred_fallthru
          _
        // Predicated region
        $region73: #{_lambda_.1} parent=47 // pred_check
          %p1059 = pneg %p233
        $region74: #{_lambda_.1} parent=47 // pred_check_branch
          %1061 = sbr.rel (%p1059) target = $region76
        $region75: #{_lambda_.1} parent=47 // pred_region
          _
        $region76: #{_lambda_.1} parent=47 // pred_fallthru
          _
        // Predicated region
        $region77: #{_lambda_.1} parent=47 // pred_check
          %p1062 = pneg %p191
        $region78: #{_lambda_.1} parent=47 // pred_check_branch
          %1064 = sbr.rel (%p1062) target = $region80
        $region79: #{_lambda_.1} parent=47 // pred_region
          %1065 = dma.done [#allocation7], 512
        $region80: #{_lambda_.1} parent=47 // pred_fallthru
          _
        // Predicated region
        $region81: #{_lambda_.1} parent=47 // pred_check
          %p1066 = pneg %p212
        $region82: #{_lambda_.1} parent=47 // pred_check_branch
          %1068 = sbr.rel (%p1066) target = $region84
        $region83: #{_lambda_.1} parent=47 // pred_region
          _
        $region84: #{_lambda_.1} parent=47 // pred_fallthru
          _
        // Predicated region
        $region85: #{_lambda_.1} parent=47 // pred_check
          %p1069 = pneg %p233
        $region86: #{_lambda_.1} parent=47 // pred_check_branch
          %1071 = sbr.rel (%p1069) target = $region88
        $region87: #{_lambda_.1} parent=47 // pred_region
          _
        $region88: #{_lambda_.1} parent=47 // pred_fallthru
          _
      $region48: #{_lambda_.1} parent=5 // pred_fallthru
        _
      %p1072 = scmp.le.s32.totalorder 2, %s21
      // Predicated region
      $region89: #{_lambda_.1} parent=5 // pred_check
        %p1073 = pneg %p1072
      $region90: #{_lambda_.1} parent=5 // pred_check_branch
        %1075 = sbr.rel (%p1073) target = $region92
      $region91: #{_lambda_.1} parent=5 // pred_region
        %s1076 = ssub.s32 %s21, 2
      $region92: #{_lambda_.1} parent=5 // pred_fallthru
        _
    $region6: #{_lambda_.1} parent=1 // loop_footer
      %s25 = sadd.s32 1, %s21
    $region7: #{_lambda_.1} parent=1 // loop_footer_branch
      %20 = sbr.rel target = $region3
    $region8: #{_lambda_.1} parent=1 // loop_exit
      _
    %1077 = vsyncpa [#allocation6], 1
    %s1078 = scalar_lea.sflag [#allocation6], 1
    %1079 = vsyncpa %s1078, 1
    %1080 = vsyncpa [#allocation9], 1
    %s1081 = scalar_lea.sflag [#allocation9], 1
    %1082 = vsyncpa %s1081, 1
    %1083 = vsyncpa [#allocation7], 1
    %s1084 = scalar_lea.sflag [#allocation7], 1
    %1085 = vsyncpa %s1084, 1

</llo_original>
